<compile_context>
chip_gen: v7x
topology: tpu7x:2x2x1
jax: 0.10.0
libtpu: 0.0.40
codegen_flags: <defaults>
</compile_context>

<pallas_src>
import jax
import jax.numpy as jnp
from jax.experimental import pallas as pl
from jax.experimental.pallas import tpu as pltpu


def _mish_kernel(x_ref, o_ref):
    x = x_ref[...].astype(jnp.float32)
    # tanh(softplus(x)) computed with a single exp:
    #   u = exp(-|x|)   (in (0, 1], never overflows)
    #   x >= 0: tanh(softplus(x)) = (1 + 2u) / (1 + 2u + 2u^2)
    #   x <  0: tanh(softplus(x)) = u(2 + u) / (2 + 2u + u^2)
    u = jnp.exp(-jnp.abs(x))
    pos = x >= 0.0
    num = jnp.where(pos, 1.0 + 2.0 * u, u * (2.0 + u))
    den = jnp.where(pos, 1.0 + 2.0 * u + 2.0 * u * u, 2.0 + 2.0 * u + u * u)
    o_ref[...] = (x * num / den).astype(o_ref.dtype)


def mish(x, *, tile_rows=2048, lanes=128):
    """Mish activation, elementwise. Accepts any shape; computed in a Pallas kernel."""
    orig_shape = x.shape
    orig_dtype = x.dtype
    n = x.size
    if n == 0:
        return x

    if n % lanes == 0:
        # Common case (NCHW with C*H*W a multiple of 128): pure reshape, no pad,
        # no trailing slice -> no extra HBM passes outside the kernel.
        rows = n // lanes
        x2d = jnp.reshape(x, (rows, lanes))
        needs_unpad = False
    else:
        # Rare fallback: pad only up to the next lane multiple (one extra copy).
        rows = pl.cdiv(n, lanes)
        x_flat = jnp.reshape(x, (-1,))
        x_flat = jnp.pad(x_flat, (0, rows * lanes - n))
        x2d = jnp.reshape(x_flat, (rows, lanes))
        needs_unpad = True

    # block_rows is either tile_rows (a multiple of 8) or the full row extent,
    # so the (8, 128) tiling constraint is always satisfied. Partial last blocks
    # (rows % block_rows != 0) are handled by Pallas: OOB output writes are
    # masked, and garbage read in the padded region cannot corrupt results.
    block_rows = min(tile_rows, rows)
    grid = (pl.cdiv(rows, block_rows),)

    itemsize = jnp.dtype(orig_dtype).itemsize
    cost = pl.CostEstimate(
        flops=10 * n,
        transcendentals=2 * n,          # exp + reciprocal per element
        bytes_accessed=2 * n * itemsize,
    )

    out2d = pl.pallas_call(
        _mish_kernel,
        out_shape=jax.ShapeDtypeStruct((rows, lanes), orig_dtype),
        grid_spec=pltpu.PrefetchScalarGridSpec(
            num_scalar_prefetch=0,
            grid=grid,
            in_specs=[pl.BlockSpec((block_rows, lanes), lambda i: (i, 0))],
            out_specs=pl.BlockSpec((block_rows, lanes), lambda i: (i, 0)),
        ),
        compiler_params=pltpu.CompilerParams(
            dimension_semantics=("parallel",),
        ),
        cost_estimate=cost,
    )(x2d)

    if needs_unpad:
        out_flat = jnp.reshape(out2d, (-1,))[:n]
        return jnp.reshape(out_flat, orig_shape)
    return jnp.reshape(out2d, orig_shape)


def mish_ref(x):
    xf = x.astype(jnp.float32)
    sp = jnp.maximum(xf, 0.0) + jnp.log1p(jnp.exp(-jnp.abs(xf)))
    return (xf * jnp.tanh(sp)).astype(x.dtype)


if __name__ == "__main__":
    key = jax.random.PRNGKey(0)
    # NCHW input, matching PyTorch conv conventions.
    x = jax.random.normal(key, (2, 4, 16, 16), dtype=jnp.float32) * 3.0

    y = mish(x)
    y = jax.block_until_ready(y)

    y_ref = mish_ref(x)
    assert y.shape == x.shape and y.dtype == x.dtype
    assert jnp.allclose(y, y_ref, atol=1e-5, rtol=1e-5)

    # Also exercise a shape whose row count is not a block multiple (partial block)
    # and a non-lane-multiple shape (pad fallback path).
    for shape in [(2, 8, 20, 32), (3, 5, 7, 11)]:
        xi = jax.random.normal(jax.random.PRNGKey(1), shape, dtype=jnp.float32) * 3.0
        yi = jax.block_until_ready(mish(xi))
        assert jnp.allclose(yi, mish_ref(xi), atol=1e-5, rtol=1e-5)

    print("KERNEL_OK")
</pallas_src>

<mosaic_0001>
module attributes {stable_mosaic.version = 11 : i64} {
  func.func @_mish_kernel(%arg0: i32, %arg1: memref<16x128xf32, #tpu.memory_space<vmem>>, %arg2: memref<16x128xf32, #tpu.memory_space<vmem>>) attributes {dimension_semantics = [#tpu.dimension_semantics<parallel>], iteration_bounds = array<i64: 1>, scalar_prefetch = 0 : i64, scratch_operands = 0 : i64, tpu.core_type = #tpu.core_type<tc>, window_params = [{transform_indices = @transform_0, window_bounds = array<i64: 16, 128>}, {transform_indices = @transform_1, window_bounds = array<i64: 16, 128>}]} {
    %c0 = arith.constant 0 : index
    %c0_0 = arith.constant 0 : index
    %0 = vector.load %arg1[%c0, %c0_0] : memref<16x128xf32, #tpu.memory_space<vmem>>, vector<16x128xf32>
    %1 = math.absf %0 : vector<16x128xf32>
    %cst = arith.constant 0.000000e+00 : f32
    %2 = vector.broadcast %cst : f32 to vector<16x128xf32>
    %3 = arith.subf %2, %1 : vector<16x128xf32>
    %4 = math.exp %3 : vector<16x128xf32>
    %cst_1 = arith.constant 0.000000e+00 : f32
    %5 = vector.broadcast %cst_1 : f32 to vector<16x128xf32>
    %6 = arith.cmpf oge, %0, %5 : vector<16x128xf32>
    %cst_2 = arith.constant 2.000000e+00 : f32
    %7 = vector.broadcast %cst_2 : f32 to vector<16x128xf32>
    %8 = arith.mulf %7, %4 : vector<16x128xf32>
    %cst_3 = arith.constant 1.000000e+00 : f32
    %9 = vector.broadcast %cst_3 : f32 to vector<16x128xf32>
    %10 = arith.addf %9, %8 : vector<16x128xf32>
    %cst_4 = arith.constant 2.000000e+00 : f32
    %11 = vector.broadcast %cst_4 : f32 to vector<16x128xf32>
    %12 = arith.addf %11, %4 : vector<16x128xf32>
    %13 = arith.mulf %4, %12 : vector<16x128xf32>
    %14 = arith.select %6, %10, %13 : vector<16x128xi1>, vector<16x128xf32>
    %cst_5 = arith.constant 2.000000e+00 : f32
    %15 = vector.broadcast %cst_5 : f32 to vector<16x128xf32>
    %16 = arith.mulf %15, %4 : vector<16x128xf32>
    %cst_6 = arith.constant 1.000000e+00 : f32
    %17 = vector.broadcast %cst_6 : f32 to vector<16x128xf32>
    %18 = arith.addf %17, %16 : vector<16x128xf32>
    %cst_7 = arith.constant 2.000000e+00 : f32
    %19 = vector.broadcast %cst_7 : f32 to vector<16x128xf32>
    %20 = arith.mulf %19, %4 : vector<16x128xf32>
    %21 = arith.mulf %20, %4 : vector<16x128xf32>
    %22 = arith.addf %18, %21 : vector<16x128xf32>
    %cst_8 = arith.constant 2.000000e+00 : f32
    %23 = vector.broadcast %cst_8 : f32 to vector<16x128xf32>
    %24 = arith.mulf %23, %4 : vector<16x128xf32>
    %cst_9 = arith.constant 2.000000e+00 : f32
    %25 = vector.broadcast %cst_9 : f32 to vector<16x128xf32>
    %26 = arith.addf %25, %24 : vector<16x128xf32>
    %27 = arith.mulf %4, %4 : vector<16x128xf32>
    %28 = arith.addf %26, %27 : vector<16x128xf32>
    %29 = arith.select %6, %22, %28 : vector<16x128xi1>, vector<16x128xf32>
    %30 = arith.mulf %0, %14 : vector<16x128xf32>
    %31 = arith.divf %30, %29 : vector<16x128xf32>
    %c0_10 = arith.constant 0 : index
    %c0_11 = arith.constant 0 : index
    %32 = vector.load %arg2[%c0_10, %c0_11] : memref<16x128xf32, #tpu.memory_space<vmem>>, vector<16x128xf32>
    tpu.vector_store %arg2[%c0_10, %c0_11], %31 {strides = array<i32>} : memref<16x128xf32, #tpu.memory_space<vmem>>, vector<16x128xf32>,
    return
  }
  func.func @transform_0(%arg0: i32) -> (i32, i32) {
    %c0_i32 = arith.constant 0 : i32
    %c0_i32_0 = arith.constant 0 : i32
    return %arg0, %c0_i32 : i32, i32
  }
  func.func @transform_1(%arg0: i32) -> (i32, i32) {
    %c0_i32 = arith.constant 0 : i32
    %c0_i32_0 = arith.constant 0 : i32
    return %arg0, %c0_i32 : i32, i32
  }
}

</mosaic_0001>

<llo_original>
// kernel: tpu_custom_call.1
$region0: #{tpu_custom_call.1}
  #allocation0 [shape = 'u32[]', space=smem, size = 0x4, offset = 0x4, fixed_abs, tag = 'smem constant byte address 0x4 - core index']
  #allocation1 [shape = 'u32[144,128]{1,0:T(1,128)}', space=vmem, size = 0x12000, scoped, tag = 'internal scratch']
  %s0 = inlined_call_operand.hbm [shape: f32[16,128], index: 0, kind: input, shape index: {}]
  %s1 = inlined_call_operand.hbm [shape: f32[16,128], index: 1, kind: output, shape index: {}]
  %s2 = sld [smem:[#allocation0]]
  $region18: #{tpu_custom_call.1} parent=0
    _
  %s4 = ssub.s32 1, %s2
  %s5 = scalar_select 0, %s4, %s2
  $region1: #{tpu_custom_call.1} parent=0
    #allocation2 [shape = 'u8[8192]{0}', space=vmem, size = 0x2000, scoped, tag = 'input window, operand 0, single buffered']
    #allocation3 [shape = 's32[1]{0}', space=sflag, size = 0x4, scoped, tag = 'scoped memory for tpu_custom_call.1']
    #allocation4 [shape = 's32[1]{0}', space=sflag, size = 0x4, scoped, tag = 'scoped memory for tpu_custom_call.1']
    #allocation5 [shape = 'u8[8192]{0}', space=vmem, size = 0x2000, scoped, tag = 'output window, operand 0, single buffered']
    %6 = vsyncpa [#allocation3], 0
    %7 = vsyncpa [#allocation4], 0
    // Predicated region
    $region2: #{tpu_custom_call.1} parent=1 // pred_check
      _
    $region3: #{tpu_custom_call.1} parent=1 // pred_check_branch
      %9 = sbr.rel (0) target = $region5
    $region4: #{tpu_custom_call.1} parent=1 // pred_region
      %s11 = ssub.s32 256, 256
      %12 = vsyncadd [#allocation3], %s11
      %s13 = sshll.u32 [#allocation2], 4
      %s14 = int_to_ptr.vmem [resolvable:$true] %s13
      %19 = dma.hbm_to_vmem [thread:$0]  %s0, 256, %s14, [#allocation3], 128, 128, 8
    $region5: #{tpu_custom_call.1} parent=1 // pred_fallthru
      _
    // Predicated region
    $region6: #{tpu_custom_call.1} parent=1 // pred_check
      _
    $region7: #{tpu_custom_call.1} parent=1 // pred_check_branch
      %21 = sbr.rel (0) target = $region9
    $region8: #{tpu_custom_call.1} parent=1 // pred_region
      %22 = dma.done [#allocation3], 256
    $region9: #{tpu_custom_call.1} parent=1 // pred_fallthru
      _
    %v23 = vld [vmem:[#allocation2] sm:$0xff]
    %v24 = vld [vmem:[#allocation2 + $0x8] sm:$0xff]
    %v25 = vand.u32 2147483647, %v23
    %v26 = vand.u32 2147483647, %v24
    %v27 = vsub.f32 0.0, %v25
    %v28 = vsub.f32 0.0, %v26
    %v29 = vmul.f32 %v27, 1.442695
    %v30 = vpow.pop %v29
    %v31 = vmul.f32 %v28, 1.442695
    %v32 = vpow.pop %v31
    %vm33 = vcmp.ge.f32.partialorder %v23, 0.0
    %vm34 = vcmp.ge.f32.partialorder %v24, 0.0
    %v35 = vmul.f32 %v30, 2.0
    %v36 = vmul.f32 %v32, 2.0
    %v37 = vadd.f32 %v35, 1.0
    %v38 = vadd.f32 %v36, 1.0
    %v39 = vadd.f32 %v30, 2.0
    %v40 = vadd.f32 %v32, 2.0
    %v41 = vmul.f32 %v30, %v39
    %v42 = vmul.f32 %v32, %v40
    %v43 = vsel %vm33, %v37, %v41
    %v44 = vsel %vm34, %v38, %v42
    %v45 = vmul.f32 %v35, %v30
    %v46 = vmul.f32 %v36, %v32
    %v47 = vadd.f32 %v37, %v45
    %v48 = vadd.f32 %v38, %v46
    %v49 = vadd.f32 %v35, 2.0
    %v50 = vadd.f32 %v36, 2.0
    %v51 = vmul.f32 %v30, %v30
    %v52 = vmul.f32 %v32, %v32
    %v53 = vadd.f32 %v49, %v51
    %v54 = vadd.f32 %v50, %v52
    %v55 = vsel %vm33, %v47, %v53
    %v56 = vsel %vm34, %v48, %v54
    %v57 = vmul.f32 %v23, %v43
    %v58 = vmul.f32 %v24, %v44
    %v59 = vrcp.pop %v55
    %v60 = vmul.f32 %v57, %v59
    %v61 = vrcp.pop %v56
    %v62 = vmul.f32 %v58, %v61
    %63 = vst [vmem:[#allocation5] sm:$0xff] %v60
    %64 = vst [vmem:[#allocation5 + $0x8] sm:$0xff] %v62
    // Predicated region
    $region10: #{tpu_custom_call.1} parent=1 // pred_check
      _
    $region11: #{tpu_custom_call.1} parent=1 // pred_check_branch
      %66 = sbr.rel (0) target = $region13
    $region12: #{tpu_custom_call.1} parent=1 // pred_region
      %s68 = ssub.s32 256, 256
      %69 = vsyncadd [#allocation4], %s68
      %s70 = sshll.u32 [#allocation5], 4
      %s71 = int_to_ptr.vmem [resolvable:$true] %s70
      %76 = dma.vmem_to_hbm [thread:$0]  %s71, 256, %s1, [#allocation4], 128, 128, 8
    $region13: #{tpu_custom_call.1} parent=1 // pred_fallthru
      _
    // Predicated region
    $region14: #{tpu_custom_call.1} parent=1 // pred_check
      _
    $region15: #{tpu_custom_call.1} parent=1 // pred_check_branch
      %78 = sbr.rel (0) target = $region17
    $region16: #{tpu_custom_call.1} parent=1 // pred_region
      %79 = dma.done [#allocation4], 256
    $region17: #{tpu_custom_call.1} parent=1 // pred_fallthru
      _
    %80 = vsyncpa [#allocation3], 1
    %81 = vsyncpa [#allocation4], 1

</llo_original>
